<compile_context>
chip_gen: v7x
topology: tpu7x:2x2x1
jax: 0.10.0
libtpu: 0.0.40
codegen_flags: <defaults>
</compile_context>

<pallas_src>
import functools

import jax
import jax.numpy as jnp
from jax import lax
from jax.experimental import pallas as pl
from jax.experimental.pallas import tpu as pltpu


def _round_up(n: int, m: int) -> int:
    return ((n + m - 1) // m) * m


def _pick_tk(v_pad: int, target: int = 1024) -> int:
    """Largest multiple of 128 that divides v_pad and is <= target."""
    best = 128
    n = v_pad // 128
    for m in range(1, n + 1):
        tk = 128 * m
        if tk > target:
            break
        if n % m == 0:
            best = tk
    return best


def _bow_kernel(x_ref, w1_ref, b1_ref, w2_ref, b2_ref, w3_ref, b3_ref,
                out_ref, acc_ref, *, num_classes: int):
    # grid = (M tiles, K tiles); K (vocab) is the reduction axis of layer 1.
    ki = pl.program_id(1)

    @pl.when(ki == 0)
    def _init():
        # Seed the accumulator with the layer-1 bias (drops the epilogue add).
        acc_ref[...] = jnp.broadcast_to(b1_ref[...], acc_ref.shape)

    # Layer 1 partial product for this vocab tile (bf16 in, f32 accumulate).
    acc_ref[...] += jnp.dot(x_ref[...], w1_ref[...],
                            preferred_element_type=jnp.float32)

    @pl.when(ki == pl.num_programs(1) - 1)
    def _finish():
        # Layer 1 epilogue: ReLU (bias already folded into the accumulator).
        h1 = jnp.maximum(acc_ref[...], 0.0).astype(jnp.bfloat16)

        # Layer 2: Linear + ReLU.
        h2 = jnp.dot(h1, w2_ref[...], preferred_element_type=jnp.float32)
        h2 = jnp.maximum(h2 + b2_ref[...], 0.0).astype(jnp.bfloat16)

        # Layer 3: Linear -> logits in a lane-dense (tm, c_pad) block.
        logits = jnp.dot(h2, w3_ref[...], preferred_element_type=jnp.float32)
        logits = logits + b3_ref[...]

        # Mask padded class lanes so they do not affect the softmax reductions.
        lane = lax.broadcasted_iota(jnp.int32, logits.shape, 1)
        logits = jnp.where(lane < num_classes, logits, -jnp.inf)

        # log_softmax along the class (last) axis.
        m = jnp.max(logits, axis=-1, keepdims=True)
        shifted = logits - m
        lse = jnp.log(jnp.sum(jnp.exp(shifted), axis=-1, keepdims=True))
        out_ref[...] = (shifted - lse).astype(out_ref.dtype)


def _resident_spec(shape):
    """BlockSpec for a constant-index (resident) input, single-buffered."""
    index_map = lambda mi, ki: (0,) * len(shape)
    try:
        return pl.BlockSpec(shape, index_map, pipeline_mode=pl.Buffered(1))
    except TypeError:  # older API without pipeline_mode
        return pl.BlockSpec(shape, index_map)


def prepare_params(w1, b1, w2, b2, w3, b3):
    """Pad to 128 multiples and cast weights to bf16 ONCE (hoisted from forward).

    Weights are [in, out] (pre-transposed); biases [1, out].
    Zero padding is semantically inert: padded vocab rows/cols contribute 0,
    padded hidden units stay 0 through ReLU, padded class lanes are masked
    to -inf in-kernel and sliced off in the wrapper.
    """
    V, H = w1.shape
    C = w3.shape[1]
    v_pad = _round_up(V, 128)
    h_pad = _round_up(H, 128)
    c_pad = _round_up(C, 128)

    def pad2(a, rows, cols, dtype):
        a = jnp.asarray(a, dtype)
        return jnp.pad(a, ((0, rows - a.shape[0]), (0, cols - a.shape[1])))

    return {
        "w1": pad2(w1, v_pad, h_pad, jnp.bfloat16),
        "b1": pad2(b1, 1, h_pad, jnp.float32),
        "w2": pad2(w2, h_pad, h_pad, jnp.bfloat16),
        "b2": pad2(b2, 1, h_pad, jnp.float32),
        "w3": pad2(w3, h_pad, c_pad, jnp.bfloat16),
        "b3": pad2(b3, 1, c_pad, jnp.float32),
        "num_classes": C,
    }


def bow_classifier_forward(x, params, *, tk_target=1024, tm_cap=512):
    """x: [B, V] float; params from prepare_params(). Returns [B, C] f32 log-probs."""
    w1, b1 = params["w1"], params["b1"]
    w2, b2 = params["w2"], params["b2"]
    w3, b3 = params["w3"], params["b3"]
    C = params["num_classes"]

    B, V = x.shape
    v_pad, h_pad = w1.shape
    c_pad = w3.shape[1]

    # Batch tile: no over-padding of tiny batches; large batches use big tiles
    # so w1 is re-streamed from HBM fewer times (don't shrink tm just to
    # manufacture megacore parallelism -- layer 1 is HBM-bound).
    if B <= 128:
        tm = max(8, _round_up(B, 8))
    else:
        tm = min(tm_cap, _round_up(B, 128))
    b_pad = _round_up(B, tm)

    # Vocab tile: multiple of 128 that exactly divides the 128-padded vocab.
    tk = _pick_tk(v_pad, tk_target)

    # NOTE: bf16 cast of x quantizes bag-of-words counts > 256; acceptable here
    # (matches the reference recipe), flag if exact large counts matter.
    x_p = jnp.asarray(x, jnp.bfloat16)
    if (b_pad, v_pad) != (B, V):
        x_p = jnp.pad(x_p, ((0, b_pad - B), (0, v_pad - V)))

    grid = (b_pad // tm, v_pad // tk)

    in_specs = [
        pl.BlockSpec((tm, tk), lambda mi, ki: (mi, ki)),     # x tile
        pl.BlockSpec((tk, h_pad), lambda mi, ki: (ki, 0)),   # w1 tile (streamed over K)
        _resident_spec((1, h_pad)),                          # b1 (resident, 1-buffered)
        _resident_spec((h_pad, h_pad)),                      # w2
        _resident_spec((1, h_pad)),                          # b2
        _resident_spec((h_pad, c_pad)),                      # w3
        _resident_spec((1, c_pad)),                          # b3
    ]
    out_spec = pl.BlockSpec((tm, c_pad), lambda mi, ki: (mi, 0))

    # Advisory cost estimate (w1 is re-streamed once per M tile).
    m_tiles = b_pad // tm
    flops = 2 * b_pad * (v_pad * h_pad + h_pad * h_pad + h_pad * c_pad)
    transcendentals = b_pad * (c_pad + 1)
    bytes_accessed = int(
        x_p.size * 2
        + m_tiles * w1.size * 2
        + w2.size * 2 + w3.size * 2
        + (b1.size + b2.size + b3.size) * 4
        + b_pad * c_pad * 4
    )
    cost = pl.CostEstimate(flops=flops, transcendentals=transcendentals,
                           bytes_accessed=bytes_accessed)

    # Explicit VMEM budget derived from the actual chip (64 MiB v7x vs 128 MiB
    # v5e/v6e) so tile/pipeline choices do not silently OOM.
    try:
        vmem_cap = pltpu.get_tpu_info().vmem_capacity_bytes
    except Exception:  # fall back to the most restrictive generation (v7x)
        vmem_cap = 64 * 1024 * 1024
    vmem_limit = int(vmem_cap * 3 // 4)

    out_padded = pl.pallas_call(
        functools.partial(_bow_kernel, num_classes=C),
        out_shape=jax.ShapeDtypeStruct((b_pad, c_pad), jnp.float32),
        grid=grid,
        in_specs=in_specs,
        out_specs=out_spec,
        scratch_shapes=[pltpu.VMEM((tm, h_pad), jnp.float32)],
        compiler_params=pltpu.CompilerParams(
            dimension_semantics=("parallel", "arbitrary"),
            vmem_limit_bytes=vmem_limit,
        ),
        cost_estimate=cost,
    )(x_p, w1, b1, w2, b2, w3, b3)

    return out_padded[:B, :C]


def init_params(key, vocab_size, num_hops):
    """Deterministic init matching nn.Linear shapes; weights stored [in, out]."""
    h = vocab_size // 2
    ks = jax.random.split(key, 6)

    def lin(kw, kb, fan_in, fan_out):
        bound = 1.0 / (fan_in ** 0.5)
        w = jax.random.uniform(kw, (fan_in, fan_out), jnp.float32, -bound, bound)
        b = jax.random.uniform(kb, (1, fan_out), jnp.float32, -bound, bound)
        return w, b

    w1, b1 = lin(ks[0], ks[1], vocab_size, h)
    w2, b2 = lin(ks[2], ks[3], h, h)
    w3, b3 = lin(ks[4], ks[5], h, num_hops)
    return w1, b1, w2, b2, w3, b3


def reference_forward(x, w1, b1, w2, b2, w3, b3):
    """Pure-JAX reference with the same mixed-precision recipe as the kernel."""
    xb = x.astype(jnp.bfloat16)
    h1 = jnp.maximum(
        jnp.dot(xb, w1.astype(jnp.bfloat16),
                preferred_element_type=jnp.float32) + b1, 0.0).astype(jnp.bfloat16)
    h2 = jnp.maximum(
        jnp.dot(h1, w2.astype(jnp.bfloat16),
                preferred_element_type=jnp.float32) + b2, 0.0).astype(jnp.bfloat16)
    logits = jnp.dot(h2, w3.astype(jnp.bfloat16),
                     preferred_element_type=jnp.float32) + b3
    return jax.nn.log_softmax(logits, axis=1)


def _run_case(key, vocab_size, num_hops, batch):
    k_x, k_p = jax.random.split(key)
    x = jax.random.normal(k_x, (batch, vocab_size), jnp.float32)
    raw = init_params(k_p, vocab_size, num_hops)
    prepared = prepare_params(*raw)          # pad + cast once, outside forward

    out = bow_classifier_forward(x, prepared)
    out = jax.block_until_ready(out)

    ref = reference_forward(x, *raw)
    assert out.shape == (batch, num_hops), out.shape
    assert bool(jnp.all(jnp.isfinite(out)))
    assert jnp.allclose(out, ref, atol=5e-3, rtol=5e-3), float(
        jnp.max(jnp.abs(out - ref)))


if __name__ == "__main__":
    key = jax.random.PRNGKey(0)
    k0, k1 = jax.random.split(key)

    # Aligned small case: vocab 256 (hidden 128), 8 classes, batch 8.
    _run_case(k0, vocab_size=256, num_hops=8, batch=8)

    # Ragged case exercising the padding paths: vocab 200 (hidden 100),
    # 6 classes, batch 5.
    _run_case(k1, vocab_size=200, num_hops=6, batch=5)

    print("KERNEL_OK")
</pallas_src>

<mosaic_0001>
module attributes {stable_mosaic.version = 11 : i64} {
  func.func @_bow_kernel(%arg0: i32, %arg1: i32, %arg2: memref<8x256xbf16, #tpu.memory_space<vmem>>, %arg3: memref<256x128xbf16, #tpu.memory_space<vmem>>, %arg4: memref<1x128xf32, #tpu.memory_space<vmem>>, %arg5: memref<128x128xbf16, #tpu.memory_space<vmem>>, %arg6: memref<1x128xf32, #tpu.memory_space<vmem>>, %arg7: memref<128x128xbf16, #tpu.memory_space<vmem>>, %arg8: memref<1x128xf32, #tpu.memory_space<vmem>>, %arg9: memref<8x128xf32, #tpu.memory_space<vmem>>, %arg10: memref<8x128xf32, #tpu.memory_space<vmem>>) attributes {dimension_semantics = [#tpu.dimension_semantics<parallel>, #tpu.dimension_semantics<arbitrary>], iteration_bounds = array<i64: 1, 1>, scalar_prefetch = 0 : i64, scratch_operands = 1 : i64, tpu.core_type = #tpu.core_type<tc>, window_params = [{transform_indices = @transform_0, window_bounds = array<i64: 8, 256>}, {transform_indices = @transform_1, window_bounds = array<i64: 256, 128>}, {pipeline_mode = #tpu.pipeline_mode<synchronous>, transform_indices = @transform_2, window_bounds = array<i64: 1, 128>}, {pipeline_mode = #tpu.pipeline_mode<synchronous>, transform_indices = @transform_3, window_bounds = array<i64: 128, 128>}, {pipeline_mode = #tpu.pipeline_mode<synchronous>, transform_indices = @transform_4, window_bounds = array<i64: 1, 128>}, {pipeline_mode = #tpu.pipeline_mode<synchronous>, transform_indices = @transform_5, window_bounds = array<i64: 128, 128>}, {pipeline_mode = #tpu.pipeline_mode<synchronous>, transform_indices = @transform_6, window_bounds = array<i64: 1, 128>}, {transform_indices = @transform_7, window_bounds = array<i64: 8, 128>}]} {
    %c0_i32 = arith.constant 0 : i32
    %0 = arith.cmpi eq, %arg1, %c0_i32 : i32
    %1 = arith.extui %0 : i1 to i32
    %c0_i32_0 = arith.constant 0 : i32
    %2 = arith.cmpi ne, %1, %c0_i32_0 : i32
    scf.if %2 {
      %c0_10 = arith.constant 0 : index
      %c0_11 = arith.constant 0 : index
      %12 = vector.load %arg4[%c0_10, %c0_11] : memref<1x128xf32, #tpu.memory_space<vmem>>, vector<1x128xf32>
      %13 = vector.shape_cast %12 : vector<1x128xf32> to vector<1x128xf32>
      %14 = vector.broadcast %13 : vector<1x128xf32> to vector<8x128xf32>
      %c0_12 = arith.constant 0 : index
      %c0_13 = arith.constant 0 : index
      %15 = vector.load %arg10[%c0_12, %c0_13] : memref<8x128xf32, #tpu.memory_space<vmem>>, vector<8x128xf32>
      tpu.vector_store %arg10[%c0_12, %c0_13], %14 {strides = array<i32>} : memref<8x128xf32, #tpu.memory_space<vmem>>, vector<8x128xf32>,
    } else {
    }
    %c0 = arith.constant 0 : index
    %c0_1 = arith.constant 0 : index
    %3 = vector.load %arg10[%c0, %c0_1] : memref<8x128xf32, #tpu.memory_space<vmem>>, vector<8x128xf32>
    %c0_2 = arith.constant 0 : index
    %c0_3 = arith.constant 0 : index
    %4 = vector.load %arg2[%c0_2, %c0_3] : memref<8x256xbf16, #tpu.memory_space<vmem>>, vector<8x256xbf16>
    %c0_4 = arith.constant 0 : index
    %c0_5 = arith.constant 0 : index
    %5 = vector.load %arg3[%c0_4, %c0_5] : memref<256x128xbf16, #tpu.memory_space<vmem>>, vector<256x128xbf16>
    %cst = arith.constant dense<0.000000e+00> : vector<8x128xf32>
    %6 = tpu.matmul %4, %5, %cst {dimension_numbers = #tpu.dot_dimension_numbers<[1], [0], [0], [1], [0, 0, 1, 1], [], []>} : vector<8x256xbf16>, vector<256x128xbf16>, vector<8x128xf32> -> vector<8x128xf32>
    %7 = arith.addf %3, %6 : vector<8x128xf32>
    %c0_6 = arith.constant 0 : index
    %c0_7 = arith.constant 0 : index
    %8 = vector.load %arg10[%c0_6, %c0_7] : memref<8x128xf32, #tpu.memory_space<vmem>>, vector<8x128xf32>
    tpu.vector_store %arg10[%c0_6, %c0_7], %7 {strides = array<i32>} : memref<8x128xf32, #tpu.memory_space<vmem>>, vector<8x128xf32>,
    %c0_i32_8 = arith.constant 0 : i32
    %9 = arith.cmpi eq, %arg1, %c0_i32_8 : i32
    %10 = arith.extui %9 : i1 to i32
    %c0_i32_9 = arith.constant 0 : i32
    %11 = arith.cmpi ne, %10, %c0_i32_9 : i32
    scf.if %11 {
      %c0_10 = arith.constant 0 : index
      %c0_11 = arith.constant 0 : index
      %12 = vector.load %arg10[%c0_10, %c0_11] : memref<8x128xf32, #tpu.memory_space<vmem>>, vector<8x128xf32>
      %cst_12 = arith.constant 0.000000e+00 : f32
      %13 = vector.broadcast %cst_12 : f32 to vector<8x128xf32>
      %14 = arith.maximumf %12, %13 : vector<8x128xf32>
      %15 = arith.truncf %14 : vector<8x128xf32> to vector<8x128xbf16>
      %c0_13 = arith.constant 0 : index
      %c0_14 = arith.constant 0 : index
      %16 = vector.load %arg5[%c0_13, %c0_14] : memref<128x128xbf16, #tpu.memory_space<vmem>>, vector<128x128xbf16>
      %cst_15 = arith.constant dense<0.000000e+00> : vector<8x128xf32>
      %17 = tpu.matmul %15, %16, %cst_15 {dimension_numbers = #tpu.dot_dimension_numbers<[1], [0], [0], [1], [0, 0, 1, 1], [], []>} : vector<8x128xbf16>, vector<128x128xbf16>, vector<8x128xf32> -> vector<8x128xf32>
      %c0_16 = arith.constant 0 : index
      %c0_17 = arith.constant 0 : index
      %18 = vector.load %arg6[%c0_16, %c0_17] : memref<1x128xf32, #tpu.memory_space<vmem>>, vector<1x128xf32>
      %19 = vector.broadcast %18 : vector<1x128xf32> to vector<8x128xf32>
      %20 = arith.addf %17, %19 : vector<8x128xf32>
      %cst_18 = arith.constant 0.000000e+00 : f32
      %21 = vector.broadcast %cst_18 : f32 to vector<8x128xf32>
      %22 = arith.maximumf %20, %21 : vector<8x128xf32>
      %23 = arith.truncf %22 : vector<8x128xf32> to vector<8x128xbf16>
      %c0_19 = arith.constant 0 : index
      %c0_20 = arith.constant 0 : index
      %24 = vector.load %arg7[%c0_19, %c0_20] : memref<128x128xbf16, #tpu.memory_space<vmem>>, vector<128x128xbf16>
      %cst_21 = arith.constant dense<0.000000e+00> : vector<8x128xf32>
      %25 = tpu.matmul %23, %24, %cst_21 {dimension_numbers = #tpu.dot_dimension_numbers<[1], [0], [0], [1], [0, 0, 1, 1], [], []>} : vector<8x128xbf16>, vector<128x128xbf16>, vector<8x128xf32> -> vector<8x128xf32>
      %c0_22 = arith.constant 0 : index
      %c0_23 = arith.constant 0 : index
      %26 = vector.load %arg8[%c0_22, %c0_23] : memref<1x128xf32, #tpu.memory_space<vmem>>, vector<1x128xf32>
      %27 = vector.broadcast %26 : vector<1x128xf32> to vector<8x128xf32>
      %28 = arith.addf %25, %27 : vector<8x128xf32>
      %29 = tpu.iota {dimensions = array<i32: 1>} : vector<8x128xi32>
      %c8_i32 = arith.constant 8 : i32
      %30 = vector.broadcast %c8_i32 : i32 to vector<8x128xi32>
      %31 = arith.cmpi slt, %29, %30 : vector<8x128xi32>
      %cst_24 = arith.constant 0xFF800000 : f32
      %32 = vector.broadcast %cst_24 : f32 to vector<8x128xf32>
      %33 = arith.select %31, %28, %32 : vector<8x128xi1>, vector<8x128xf32>
      %cst_25 = arith.constant dense<0xFF800000> : vector<8xf32>
      %34 = vector.multi_reduction <maximumf>, %33, %cst_25 [1] : vector<8x128xf32> to vector<8xf32>
      %35 = vector.shape_cast %34 : vector<8xf32> to vector<8x1xf32>
      %36 = vector.broadcast %35 : vector<8x1xf32> to vector<8x128xf32>
      %37 = arith.subf %33, %36 : vector<8x128xf32>
      %38 = math.exp %37 : vector<8x128xf32>
      %cst_26 = arith.constant dense<0.000000e+00> : vector<8xf32>
      %39 = vector.multi_reduction <add>, %38, %cst_26 [1] : vector<8x128xf32> to vector<8xf32>
      %40 = vector.shape_cast %39 : vector<8xf32> to vector<8x1xf32>
      %41 = math.log %40 : vector<8x1xf32>
      %42 = vector.broadcast %41 : vector<8x1xf32> to vector<8x128xf32>
      %43 = arith.subf %37, %42 : vector<8x128xf32>
      %c0_27 = arith.constant 0 : index
      %c0_28 = arith.constant 0 : index
      %44 = vector.load %arg9[%c0_27, %c0_28] : memref<8x128xf32, #tpu.memory_space<vmem>>, vector<8x128xf32>
      tpu.vector_store %arg9[%c0_27, %c0_28], %43 {strides = array<i32>} : memref<8x128xf32, #tpu.memory_space<vmem>>, vector<8x128xf32>,
    } else {
    }
    return
  }
  func.func @transform_0(%arg0: i32, %arg1: i32) -> (i32, i32) {
    %c0_i32 = arith.constant 0 : i32
    return %arg0, %arg1 : i32, i32
  }
  func.func @transform_1(%arg0: i32, %arg1: i32) -> (i32, i32) {
    %c0_i32 = arith.constant 0 : i32
    %c0_i32_0 = arith.constant 0 : i32
    return %arg1, %c0_i32 : i32, i32
  }
  func.func @transform_2(%arg0: i32, %arg1: i32) -> (i32, i32) {
    %c0_i32 = arith.constant 0 : i32
    %c0_i32_0 = arith.constant 0 : i32
    %c0_i32_1 = arith.constant 0 : i32
    return %c0_i32, %c0_i32_0 : i32, i32
  }
  func.func @transform_3(%arg0: i32, %arg1: i32) -> (i32, i32) {
    %c0_i32 = arith.constant 0 : i32
    %c0_i32_0 = arith.constant 0 : i32
    %c0_i32_1 = arith.constant 0 : i32
    return %c0_i32, %c0_i32_0 : i32, i32
  }
  func.func @transform_4(%arg0: i32, %arg1: i32) -> (i32, i32) {
    %c0_i32 = arith.constant 0 : i32
    %c0_i32_0 = arith.constant 0 : i32
    %c0_i32_1 = arith.constant 0 : i32
    return %c0_i32, %c0_i32_0 : i32, i32
  }
  func.func @transform_5(%arg0: i32, %arg1: i32) -> (i32, i32) {
    %c0_i32 = arith.constant 0 : i32
    %c0_i32_0 = arith.constant 0 : i32
    %c0_i32_1 = arith.constant 0 : i32
    return %c0_i32, %c0_i32_0 : i32, i32
  }
  func.func @transform_6(%arg0: i32, %arg1: i32) -> (i32, i32) {
    %c0_i32 = arith.constant 0 : i32
    %c0_i32_0 = arith.constant 0 : i32
    %c0_i32_1 = arith.constant 0 : i32
    return %c0_i32, %c0_i32_0 : i32, i32
  }
  func.func @transform_7(%arg0: i32, %arg1: i32) -> (i32, i32) {
    %c0_i32 = arith.constant 0 : i32
    %c0_i32_0 = arith.constant 0 : i32
    return %arg0, %c0_i32 : i32, i32
  }
}

</mosaic_0001>

<llo_original>
// kernel: tpu_custom_call.1
$region0: #{tpu_custom_call.1}
  #allocation0 [shape = 'u32[]', space=smem, size = 0x4, offset = 0x4, fixed_abs, tag = 'smem constant byte address 0x4 - core index']
  #allocation1 [shape = 'u32[144,128]{1,0:T(1,128)}', space=vmem, size = 0x12000, scoped, tag = 'internal scratch']
  #allocation2 [shape = 'f32[8,128]{1,0:T(8,128)}', space=vmem, size = 0x1000, scoped, tag = 'scratch operand']
  %s0 = inlined_call_operand.hbm [shape: bf16[8,256], index: 0, kind: input, shape index: {}]
  %s1 = inlined_call_operand.hbm [shape: bf16[256,128], index: 1, kind: input, shape index: {}]
  %s2 = inlined_call_operand.vmem [shape: f32[1,128], index: 2, kind: input, shape index: {}]
  %s3 = inlined_call_operand.hbm [shape: bf16[128,128], index: 3, kind: input, shape index: {}]
  %s4 = inlined_call_operand.vmem [shape: f32[1,128], index: 4, kind: input, shape index: {}]
  %s5 = inlined_call_operand.hbm [shape: bf16[128,128], index: 5, kind: input, shape index: {}]
  %s6 = inlined_call_operand.vmem [shape: f32[1,128], index: 6, kind: input, shape index: {}]
  %s7 = inlined_call_operand.hbm [shape: f32[8,128], index: 7, kind: output, shape index: {}]
  %s8 = sld [smem:[#allocation0]]
  $region62: #{tpu_custom_call.1} parent=0
    _
  %s10 = ssub.s32 1, %s8
  %s11 = scalar_select 0, %s10, %s8
  $region1: #{tpu_custom_call.1} parent=0
    #allocation3 [shape = 'u8[4096]{0}', space=vmem, size = 0x1000, scoped, tag = 'input window, operand 0, single buffered']
    #allocation4 [shape = 's32[1]{0}', space=sflag, size = 0x4, scoped, tag = 'scoped memory for tpu_custom_call.1']
    #allocation5 [shape = 's32[1]{0}', space=sflag, size = 0x4, scoped, tag = 'scoped memory for tpu_custom_call.1']
    #allocation6 [shape = 'u8[65536]{0}', space=vmem, size = 0x10000, scoped, tag = 'input window, operand 1, single buffered']
    #allocation7 [shape = 's32[1]{0}', space=sflag, size = 0x4, scoped, tag = 'scoped memory for tpu_custom_call.1']
    #allocation8 [shape = 'u8[32768]{0}', space=vmem, size = 0x8000, scoped, tag = 'input window, operand 3, single buffered']
    #allocation9 [shape = 'u8[32768]{0}', space=vmem, size = 0x8000, scoped, tag = 'input window, operand 5, single buffered']
    #allocation10 [shape = 's32[1]{0}', space=sflag, size = 0x4, scoped, tag = 'scoped memory for tpu_custom_call.1']
    #allocation11 [shape = 'u8[4096]{0}', space=vmem, size = 0x1000, scoped, tag = 'output window, operand 0, single buffered']
    %12 = vsyncpa [#allocation4], 0
    %13 = vsyncpa [#allocation7], 0
    %14 = vsyncpa [#allocation10], 0
    %15 = vsyncpa [#allocation5], 0
    // Predicated region
    $region2: #{tpu_custom_call.1} parent=1 // pred_check
      _
    $region3: #{tpu_custom_call.1} parent=1 // pred_check_branch
      %17 = sbr.rel (0) target = $region5
    $region4: #{tpu_custom_call.1} parent=1 // pred_region
      %s19 = ssub.s32 128, 128
      %20 = vsyncadd [#allocation4], %s19
      %s22 = sshll.u32 [#allocation3], 4
      %s23 = int_to_ptr.vmem [resolvable:$true] %s22
      %25 = dma.hbm_to_vmem [thread:$0]  %s0, 128, %s23, [#allocation4]
    $region5: #{tpu_custom_call.1} parent=1 // pred_fallthru
      _
    // Predicated region
    $region6: #{tpu_custom_call.1} parent=1 // pred_check
      _
    $region7: #{tpu_custom_call.1} parent=1 // pred_check_branch
      %27 = sbr.rel (0) target = $region9
    $region8: #{tpu_custom_call.1} parent=1 // pred_region
      %s29 = ssub.s32 2048, 2048
      %30 = vsyncadd [#allocation7], %s29
      %s31 = sshll.u32 [#allocation6], 4
      %s32 = int_to_ptr.vmem [resolvable:$true] %s31
      %37 = dma.hbm_to_vmem [thread:$0]  %s1, 2048, %s32, [#allocation7], 64, 64, 4
    $region9: #{tpu_custom_call.1} parent=1 // pred_fallthru
      _
    // Predicated region
    $region10: #{tpu_custom_call.1} parent=1 // pred_check
      _
    $region11: #{tpu_custom_call.1} parent=1 // pred_check_branch
      %39 = sbr.rel (0) target = $region13
    $region12: #{tpu_custom_call.1} parent=1 // pred_region
      _
    $region13: #{tpu_custom_call.1} parent=1 // pred_fallthru
      _
    // Predicated region
    $region14: #{tpu_custom_call.1} parent=1 // pred_check
      _
    $region15: #{tpu_custom_call.1} parent=1 // pred_check_branch
      %41 = sbr.rel (0) target = $region17
    $region16: #{tpu_custom_call.1} parent=1 // pred_region
      %s43 = ssub.s32 1024, 1024
      %44 = vsyncadd [#allocation7], %s43
      %s45 = sshll.u32 [#allocation8], 4
      %s46 = int_to_ptr.vmem [resolvable:$true] %s45
      %51 = dma.hbm_to_vmem [thread:$0]  %s3, 1024, %s46, [#allocation7], 64, 64, 4
    $region17: #{tpu_custom_call.1} parent=1 // pred_fallthru
      _
    // Predicated region
    $region18: #{tpu_custom_call.1} parent=1 // pred_check
      _
    $region19: #{tpu_custom_call.1} parent=1 // pred_check_branch
      %53 = sbr.rel (0) target = $region21
    $region20: #{tpu_custom_call.1} parent=1 // pred_region
      _
    $region21: #{tpu_custom_call.1} parent=1 // pred_fallthru
      _
    // Predicated region
    $region22: #{tpu_custom_call.1} parent=1 // pred_check
      _
    $region23: #{tpu_custom_call.1} parent=1 // pred_check_branch
      %55 = sbr.rel (0) target = $region25
    $region24: #{tpu_custom_call.1} parent=1 // pred_region
      %s57 = ssub.s32 1024, 1024
      %58 = vsyncadd [#allocation10], %s57
      %s59 = sshll.u32 [#allocation9], 4
      %s60 = int_to_ptr.vmem [resolvable:$true] %s59
      %65 = dma.hbm_to_vmem [thread:$0]  %s5, 1024, %s60, [#allocation10], 64, 64, 4
    $region25: #{tpu_custom_call.1} parent=1 // pred_fallthru
      _
    // Predicated region
    $region26: #{tpu_custom_call.1} parent=1 // pred_check
      _
    $region27: #{tpu_custom_call.1} parent=1 // pred_check_branch
      %67 = sbr.rel (0) target = $region29
    $region28: #{tpu_custom_call.1} parent=1 // pred_region
      _
    $region29: #{tpu_custom_call.1} parent=1 // pred_fallthru
      _
    // Predicated region
    $region30: #{tpu_custom_call.1} parent=1 // pred_check
      _
    $region31: #{tpu_custom_call.1} parent=1 // pred_check_branch
      %69 = sbr.rel (0) target = $region33
    $region32: #{tpu_custom_call.1} parent=1 // pred_region
      %70 = dma.done [#allocation4], 128
    $region33: #{tpu_custom_call.1} parent=1 // pred_fallthru
      _
    // Predicated region
    $region34: #{tpu_custom_call.1} parent=1 // pred_check
      _
    $region35: #{tpu_custom_call.1} parent=1 // pred_check_branch
      %72 = sbr.rel (0) target = $region37
    $region36: #{tpu_custom_call.1} parent=1 // pred_region
      %73 = dma.done [#allocation7], 2048
    $region37: #{tpu_custom_call.1} parent=1 // pred_fallthru
      _
    // Predicated region
    $region38: #{tpu_custom_call.1} parent=1 // pred_check
      _
    $region39: #{tpu_custom_call.1} parent=1 // pred_check_branch
      %75 = sbr.rel (0) target = $region41
    $region40: #{tpu_custom_call.1} parent=1 // pred_region
      %76 = dma.done [#allocation7], 1024
    $region41: #{tpu_custom_call.1} parent=1 // pred_fallthru
      _
    // Predicated region
    $region42: #{tpu_custom_call.1} parent=1 // pred_check
      _
    $region43: #{tpu_custom_call.1} parent=1 // pred_check_branch
      %78 = sbr.rel (0) target = $region45
    $region44: #{tpu_custom_call.1} parent=1 // pred_region
      %79 = dma.done [#allocation10], 1024
    $region45: #{tpu_custom_call.1} parent=1 // pred_fallthru
      _
    %p81 = scmp.eq.s32.totalorder 0, 0
    // Predicated region
    $region46: #{tpu_custom_call.1} parent=1 // pred_check
      %p82 = pneg %p81
    $region47: #{tpu_custom_call.1} parent=1 // pred_check_branch
      %84 = sbr.rel (%p82) target = $region49
    $region48: #{tpu_custom_call.1} parent=1 // pred_region
      %v85 = vld [vmem:[%s2] sm:$0x1]
      %v87 = vlaneseq
      %v88 = vshrl.u32 %v87, 7
      %v89 = vsub.s32 0, %v88
      %v90 = vrot.slane %v85, %v89
      %92 = vst [vmem:[#allocation2] sm:$0xff] %v90
    $region49: #{tpu_custom_call.1} parent=1 // pred_fallthru
      _
    %v93 = vld [vmem:[#allocation2] sm:$0xff]
    %v94 = vld [vmem:[#allocation3] sm:$0xff]
    %v95 = vld [vmem:[#allocation6] sm:$0xf]
    %v96 = vld [vmem:[#allocation6 + $0x4] sm:$0xf]
    %v97 = vld [vmem:[#allocation6 + $0x8] sm:$0xf]
    %v98 = vld [vmem:[#allocation6 + $0xc] sm:$0xf]
    %v99 = vld [vmem:[#allocation6 + $0x10] sm:$0xf]
    %v100 = vld [vmem:[#allocation6 + $0x14] sm:$0xf]
    %v101 = vld [vmem:[#allocation6 + $0x18] sm:$0xf]
    %v102 = vld [vmem:[#allocation6 + $0x1c] sm:$0xf]
    %v103 = vld [vmem:[#allocation6 + $0x20] sm:$0xf]
    %v104 = vld [vmem:[#allocation6 + $0x24] sm:$0xf]
    %v105 = vld [vmem:[#allocation6 + $0x28] sm:$0xf]
    %v106 = vld [vmem:[#allocation6 + $0x2c] sm:$0xf]
    %v107 = vld [vmem:[#allocation6 + $0x30] sm:$0xf]
    %v108 = vld [vmem:[#allocation6 + $0x34] sm:$0xf]
    %v109 = vld [vmem:[#allocation6 + $0x38] sm:$0xf]
    %v110 = vld [vmem:[#allocation6 + $0x3c] sm:$0xf]
    %v111 = vld [vmem:[#allocation6 + $0x40] sm:$0xf]
    %v112 = vld [vmem:[#allocation6 + $0x44] sm:$0xf]
    %v113 = vld [vmem:[#allocation6 + $0x48] sm:$0xf]
    %v114 = vld [vmem:[#allocation6 + $0x4c] sm:$0xf]
    %v115 = vld [vmem:[#allocation6 + $0x50] sm:$0xf]
    %v116 = vld [vmem:[#allocation6 + $0x54] sm:$0xf]
    %v117 = vld [vmem:[#allocation6 + $0x58] sm:$0xf]
    %v118 = vld [vmem:[#allocation6 + $0x5c] sm:$0xf]
    %v119 = vld [vmem:[#allocation6 + $0x60] sm:$0xf]
    %v120 = vld [vmem:[#allocation6 + $0x64] sm:$0xf]
    %v121 = vld [vmem:[#allocation6 + $0x68] sm:$0xf]
    %v122 = vld [vmem:[#allocation6 + $0x6c] sm:$0xf]
    %v123 = vld [vmem:[#allocation6 + $0x70] sm:$0xf]
    %v124 = vld [vmem:[#allocation6 + $0x74] sm:$0xf]
    %v125 = vld [vmem:[#allocation6 + $0x78] sm:$0xf]
    %v126 = vld [vmem:[#allocation6 + $0x7c] sm:$0xf]
    %v128 = vunpack.c.l.b16 %v94
    %v129 = vunpack.c.h.b16 %v94
    %v130 = vpack.c.b16 %v128, %v128
    %v131 = vpack.c.b16 %v129, %v129
    %v166 = vunpack.c.l.b16 %v95
    %v167 = vunpack.c.l.b16 %v96
    %v168 = vunpack.c.l.b16 %v97
    %v169 = vunpack.c.l.b16 %v98
    %v170 = vunpack.c.l.b16 %v99
    %v171 = vunpack.c.l.b16 %v100
    %v172 = vunpack.c.l.b16 %v101
    %v173 = vunpack.c.l.b16 %v102
    %v174 = vunpack.c.l.b16 %v103
    %v175 = vunpack.c.l.b16 %v104
    %v176 = vunpack.c.l.b16 %v105
    %v177 = vunpack.c.l.b16 %v106
    %v178 = vunpack.c.l.b16 %v107
    %v179 = vunpack.c.l.b16 %v108
    %v180 = vunpack.c.l.b16 %v109
    %v181 = vunpack.c.l.b16 %v110
    %v182 = vunpack.c.l.b16 %v111
    %v183 = vunpack.c.l.b16 %v112
    %v184 = vunpack.c.l.b16 %v113
    %v185 = vunpack.c.l.b16 %v114
    %v186 = vunpack.c.l.b16 %v115
    %v187 = vunpack.c.l.b16 %v116
    %v188 = vunpack.c.l.b16 %v117
    %v189 = vunpack.c.l.b16 %v118
    %v190 = vunpack.c.l.b16 %v119
    %v191 = vunpack.c.l.b16 %v120
    %v192 = vunpack.c.l.b16 %v121
    %v193 = vunpack.c.l.b16 %v122
    %v194 = vunpack.c.l.b16 %v123
    %v195 = vunpack.c.l.b16 %v124
    %v196 = vunpack.c.l.b16 %v125
    %v197 = vunpack.c.l.b16 %v126
    %v198 = vpack.c.b16 %v167, %v166
    %v199 = vpack.c.b16 %v169, %v168
    %v200 = vpack.c.b16 %v171, %v170
    %v201 = vpack.c.b16 %v173, %v172
    %v202 = vpack.c.b16 %v175, %v174
    %v203 = vpack.c.b16 %v177, %v176
    %v204 = vpack.c.b16 %v179, %v178
    %v205 = vpack.c.b16 %v181, %v180
    %v206 = vpack.c.b16 %v183, %v182
    %v207 = vpack.c.b16 %v185, %v184
    %v208 = vpack.c.b16 %v187, %v186
    %v209 = vpack.c.b16 %v189, %v188
    %v210 = vpack.c.b16 %v191, %v190
    %v211 = vpack.c.b16 %v193, %v192
    %v212 = vpack.c.b16 %v195, %v194
    %v213 = vpack.c.b16 %v197, %v196
    %230 = vmatprep.subr.bf16.mxu0 0
    %231 = vmatpush1.bf16.msra.mxu0 %v198
    %232 = vmatprep.subr.bf16.mxu0 0
    %233 = vmatpush1.bf16.msra.mxu0 %v199
    %234 = vmatprep.subr.bf16.mxu0 0
    %235 = vmatpush1.bf16.msra.mxu0 %v200
    %236 = vmatprep.subr.bf16.mxu0 0
    %237 = vmatpush1.bf16.msra.mxu0 %v201
    %238 = vmatprep.subr.bf16.mxu0 0
    %239 = vmatpush1.bf16.msra.mxu0 %v202
    %240 = vmatprep.subr.bf16.mxu0 0
    %241 = vmatpush1.bf16.msra.mxu0 %v203
    %242 = vmatprep.subr.bf16.mxu0 0
    %243 = vmatpush1.bf16.msra.mxu0 %v204
    %244 = vmatprep.subr.bf16.mxu0 0
    %245 = vmatpush1.bf16.msra.mxu0 %v205
    %246 = vmatprep.subr.bf16.mxu0 0
    %247 = vmatpush1.bf16.msra.mxu0 %v206
    %248 = vmatprep.subr.bf16.mxu0 0
    %249 = vmatpush1.bf16.msra.mxu0 %v207
    %250 = vmatprep.subr.bf16.mxu0 0
    %251 = vmatpush1.bf16.msra.mxu0 %v208
    %252 = vmatprep.subr.bf16.mxu0 0
    %253 = vmatpush1.bf16.msra.mxu0 %v209
    %254 = vmatprep.subr.bf16.mxu0 0
    %255 = vmatpush1.bf16.msra.mxu0 %v210
    %256 = vmatprep.subr.bf16.mxu0 0
    %257 = vmatpush1.bf16.msra.mxu0 %v211
    %258 = vmatprep.subr.bf16.mxu0 0
    %259 = vmatpush1.bf16.msra.mxu0 %v212
    %260 = vmatprep.subr.bf16.mxu0 0
    %261 = vmatpush1.bf16.msra.mxu0 %v213
    %262 = vmatprep.mubr.bf16.mxu0 %v131
    %263 = vmatmul.mubr.bf16.gmra.mrb[0].mxu0 %v130
    %v264 = vpop.f32.mrb[0].mxu0
    %v265 = vadd.f32 0.0, %v264
    %v266 = vpop.f32.mrb[0].mxu0
    %v267 = vpop.f32.mrb[0].mxu0
    %v268 = vpop.f32.mrb[0].mxu0
    %269 = vdwg.mxu0
    %v270 = vadd.f32 %v93, %v265
    %271 = vst [vmem:[#allocation2] sm:$0xff] %v270
    // Predicated region
    $region50: #{tpu_custom_call.1} parent=1 // pred_check
      %p272 = pneg %p81
    $region51: #{tpu_custom_call.1} parent=1 // pred_check_branch
      %274 = sbr.rel (%p272) target = $region53
    $region52: #{tpu_custom_call.1} parent=1 // pred_region
      %v275 = vld [vmem:[#allocation2] sm:$0xff]
      %v276 = vmax.f32 %v275, 0.0
      %v277 = vpack.c.bf16 %v276, %v276
      %v278 = vld [vmem:[#allocation8] sm:$0xf]
      %v279 = vld [vmem:[#allocation8 + $0x4] sm:$0xf]
      %v280 = vld [vmem:[#allocation8 + $0x8] sm:$0xf]
      %v281 = vld [vmem:[#allocation8 + $0xc] sm:$0xf]
      %v282 = vld [vmem:[#allocation8 + $0x10] sm:$0xf]
      %v283 = vld [vmem:[#allocation8 + $0x14] sm:$0xf]
      %v284 = vld [vmem:[#allocation8 + $0x18] sm:$0xf]
      %v285 = vld [vmem:[#allocation8 + $0x1c] sm:$0xf]
      %v286 = vld [vmem:[#allocation8 + $0x20] sm:$0xf]
      %v287 = vld [vmem:[#allocation8 + $0x24] sm:$0xf]
      %v288 = vld [vmem:[#allocation8 + $0x28] sm:$0xf]
      %v289 = vld [vmem:[#allocation8 + $0x2c] sm:$0xf]
      %v290 = vld [vmem:[#allocation8 + $0x30] sm:$0xf]
      %v291 = vld [vmem:[#allocation8 + $0x34] sm:$0xf]
      %v292 = vld [vmem:[#allocation8 + $0x38] sm:$0xf]
      %v293 = vld [vmem:[#allocation8 + $0x3c] sm:$0xf]
      %v294 = vld [vmem:[%s4] sm:$0x1]
      %v296 = vlaneseq
      %v297 = vshrl.u32 %v296, 7
      %v298 = vsub.s32 0, %v297
      %v299 = vrot.slane %v294, %v298
      %v317 = vunpack.c.l.b16 %v278
      %v318 = vunpack.c.l.b16 %v279
      %v319 = vunpack.c.l.b16 %v280
      %v320 = vunpack.c.l.b16 %v281
      %v321 = vunpack.c.l.b16 %v282
      %v322 = vunpack.c.l.b16 %v283
      %v323 = vunpack.c.l.b16 %v284
      %v324 = vunpack.c.l.b16 %v285
      %v325 = vunpack.c.l.b16 %v286
      %v326 = vunpack.c.l.b16 %v287
      %v327 = vunpack.c.l.b16 %v288
      %v328 = vunpack.c.l.b16 %v289
      %v329 = vunpack.c.l.b16 %v290
      %v330 = vunpack.c.l.b16 %v291
      %v331 = vunpack.c.l.b16 %v292
      %v332 = vunpack.c.l.b16 %v293
      %v333 = vpack.c.b16 %v318, %v317
      %v334 = vpack.c.b16 %v320, %v319
      %v335 = vpack.c.b16 %v322, %v321
      %v336 = vpack.c.b16 %v324, %v323
      %v337 = vpack.c.b16 %v326, %v325
      %v338 = vpack.c.b16 %v328, %v327
      %v339 = vpack.c.b16 %v330, %v329
      %v340 = vpack.c.b16 %v332, %v331
      %349 = vmatprep.subr.bf16.mxu0 0
      %350 = vmatpush1.bf16.msra.mxu0 %v333
      %351 = vmatprep.subr.bf16.mxu0 0
      %352 = vmatpush1.bf16.msra.mxu0 %v334
      %353 = vmatprep.subr.bf16.mxu0 0
      %354 = vmatpush1.bf16.msra.mxu0 %v335
      %355 = vmatprep.subr.bf16.mxu0 0
      %356 = vmatpush1.bf16.msra.mxu0 %v336
      %357 = vmatprep.subr.bf16.mxu0 0
      %358 = vmatpush1.bf16.msra.mxu0 %v337
      %359 = vmatprep.subr.bf16.mxu0 0
      %360 = vmatpush1.bf16.msra.mxu0 %v338
      %361 = vmatprep.subr.bf16.mxu0 0
      %362 = vmatpush1.bf16.msra.mxu0 %v339
      %363 = vmatprep.subr.bf16.mxu0 0
      %364 = vmatpush1.bf16.msra.mxu0 %v340
      %365 = vmatprep.subr.bf16.mxu0 0
      %366 = vmatpush1.bf16.msra.mxu0 0
      %367 = vmatprep.subr.bf16.mxu0 0
      %368 = vmatpush1.bf16.msra.mxu0 0
      %369 = vmatprep.subr.bf16.mxu0 0
      %370 = vmatpush1.bf16.msra.mxu0 0
      %371 = vmatprep.subr.bf16.mxu0 0
      %372 = vmatpush1.bf16.msra.mxu0 0
      %373 = vmatprep.subr.bf16.mxu0 0
      %374 = vmatpush1.bf16.msra.mxu0 0
      %375 = vmatprep.subr.bf16.mxu0 0
      %376 = vmatpush1.bf16.msra.mxu0 0
      %377 = vmatprep.subr.bf16.mxu0 0
      %378 = vmatpush1.bf16.msra.mxu0 0
      %379 = vmatprep.subr.bf16.mxu0 0
      %380 = vmatpush1.bf16.msra.mxu0 0
      %381 = vmatprep.mubr.bf16.mxu0 0
      %382 = vmatmul.mubr.bf16.gmra.mrb[0].mxu0 %v277
      %v383 = vpop.f32.mrb[0].mxu0
      %v384 = vadd.f32 %v299, %v383
      %v385 = vpop.f32.mrb[0].mxu0
      %v386 = vpop.f32.mrb[0].mxu0
      %v387 = vpop.f32.mrb[0].mxu0
      %388 = vdwg.mxu0
      %v389 = vmax.f32 %v384, 0.0
      %v390 = vpack.c.bf16 %v389, %v389
      %v391 = vld [vmem:[#allocation9] sm:$0xf]
      %v392 = vld [vmem:[#allocation9 + $0x4] sm:$0xf]
      %v393 = vld [vmem:[#allocation9 + $0x8] sm:$0xf]
      %v394 = vld [vmem:[#allocation9 + $0xc] sm:$0xf]
      %v395 = vld [vmem:[#allocation9 + $0x10] sm:$0xf]
      %v396 = vld [vmem:[#allocation9 + $0x14] sm:$0xf]
      %v397 = vld [vmem:[#allocation9 + $0x18] sm:$0xf]
      %v398 = vld [vmem:[#allocation9 + $0x1c] sm:$0xf]
      %v399 = vld [vmem:[#allocation9 + $0x20] sm:$0xf]
      %v400 = vld [vmem:[#allocation9 + $0x24] sm:$0xf]
      %v401 = vld [vmem:[#allocation9 + $0x28] sm:$0xf]
      %v402 = vld [vmem:[#allocation9 + $0x2c] sm:$0xf]
      %v403 = vld [vmem:[#allocation9 + $0x30] sm:$0xf]
      %v404 = vld [vmem:[#allocation9 + $0x34] sm:$0xf]
      %v405 = vld [vmem:[#allocation9 + $0x38] sm:$0xf]
      %v406 = vld [vmem:[#allocation9 + $0x3c] sm:$0xf]
      %v407 = vld [vmem:[%s6] sm:$0x1]
      %v409 = vlaneseq
      %v410 = vshrl.u32 %v409, 7
      %v411 = vsub.s32 0, %v410
      %v412 = vrot.slane %v407, %v411
      %v430 = vunpack.c.l.b16 %v391
      %v431 = vunpack.c.l.b16 %v392
      %v432 = vunpack.c.l.b16 %v393
      %v433 = vunpack.c.l.b16 %v394
      %v434 = vunpack.c.l.b16 %v395
      %v435 = vunpack.c.l.b16 %v396
      %v436 = vunpack.c.l.b16 %v397
      %v437 = vunpack.c.l.b16 %v398
      %v438 = vunpack.c.l.b16 %v399
      %v439 = vunpack.c.l.b16 %v400
      %v440 = vunpack.c.l.b16 %v401
      %v441 = vunpack.c.l.b16 %v402
      %v442 = vunpack.c.l.b16 %v403
      %v443 = vunpack.c.l.b16 %v404
      %v444 = vunpack.c.l.b16 %v405
      %v445 = vunpack.c.l.b16 %v406
      %v446 = vpack.c.b16 %v431, %v430
      %v447 = vpack.c.b16 %v433, %v432
      %v448 = vpack.c.b16 %v435, %v434
      %v449 = vpack.c.b16 %v437, %v436
      %v450 = vpack.c.b16 %v439, %v438
      %v451 = vpack.c.b16 %v441, %v440
      %v452 = vpack.c.b16 %v443, %v442
      %v453 = vpack.c.b16 %v445, %v444
      %462 = vmatprep.subr.bf16.mxu0 0
      %463 = vmatpush1.bf16.msra.mxu0 %v446
      %464 = vmatprep.subr.bf16.mxu0 0
      %465 = vmatpush1.bf16.msra.mxu0 %v447
      %466 = vmatprep.subr.bf16.mxu0 0
      %467 = vmatpush1.bf16.msra.mxu0 %v448
      %468 = vmatprep.subr.bf16.mxu0 0
      %469 = vmatpush1.bf16.msra.mxu0 %v449
      %470 = vmatprep.subr.bf16.mxu0 0
      %471 = vmatpush1.bf16.msra.mxu0 %v450
      %472 = vmatprep.subr.bf16.mxu0 0
      %473 = vmatpush1.bf16.msra.mxu0 %v451
      %474 = vmatprep.subr.bf16.mxu0 0
      %475 = vmatpush1.bf16.msra.mxu0 %v452
      %476 = vmatprep.subr.bf16.mxu0 0
      %477 = vmatpush1.bf16.msra.mxu0 %v453
      %478 = vmatprep.subr.bf16.mxu0 0
      %479 = vmatpush1.bf16.msra.mxu0 0
      %480 = vmatprep.subr.bf16.mxu0 0
      %481 = vmatpush1.bf16.msra.mxu0 0
      %482 = vmatprep.subr.bf16.mxu0 0
      %483 = vmatpush1.bf16.msra.mxu0 0
      %484 = vmatprep.subr.bf16.mxu0 0
      %485 = vmatpush1.bf16.msra.mxu0 0
      %486 = vmatprep.subr.bf16.mxu0 0
      %487 = vmatpush1.bf16.msra.mxu0 0
      %488 = vmatprep.subr.bf16.mxu0 0
      %489 = vmatpush1.bf16.msra.mxu0 0
      %490 = vmatprep.subr.bf16.mxu0 0
      %491 = vmatpush1.bf16.msra.mxu0 0
      %492 = vmatprep.subr.bf16.mxu0 0
      %493 = vmatpush1.bf16.msra.mxu0 0
      %494 = vmatprep.mubr.bf16.mxu0 0
      %495 = vmatmul.mubr.bf16.gmra.mrb[0].mxu0 %v390
      %v496 = vpop.f32.mrb[0].mxu0
      %v497 = vadd.f32 %v412, %v496
      %v498 = vpop.f32.mrb[0].mxu0
      %v499 = vpop.f32.mrb[0].mxu0
      %v500 = vpop.f32.mrb[0].mxu0
      %501 = vdwg.mxu0
      %v502 = vlaneseq
      %v503 = vand.u32 %v502, 127
      %vm504 = vcmp.lt.s32.totalorder %v503, 8
      %v505 = vsel %vm504, %v497, -inf
      %506 = vmax.xlane.f32.xlu0 %v505
      %v507 = vpop.xlane.xlu0 %506
      %v508 = vsub.f32 %v505, %v507
      %v509 = vmul.f32 %v508, 1.442695
      %v510 = vpow.pop %v509
      %511 = vadd.xlane.f32.xlu0 %v510
      %v512 = vpop.xlane.xlu0 %511
      %v513 = vlog2.pop %v512
      %v514 = vmul.f32 %v513, 0.6931472
      %v515 = vsub.f32 %v508, %v514
      %516 = vst [vmem:[#allocation11] sm:$0xff] %v515
    $region53: #{tpu_custom_call.1} parent=1 // pred_fallthru
      _
    // Predicated region
    $region54: #{tpu_custom_call.1} parent=1 // pred_check
      _
    $region55: #{tpu_custom_call.1} parent=1 // pred_check_branch
      %518 = sbr.rel (0) target = $region57
    $region56: #{tpu_custom_call.1} parent=1 // pred_region
      %s520 = ssub.s32 128, 128
      %521 = vsyncadd [#allocation5], %s520
      %s523 = sshll.u32 [#allocation11], 4
      %s524 = int_to_ptr.vmem [resolvable:$true] %s523
      %526 = dma.vmem_to_hbm [thread:$0]  %s524, 128, %s7, [#allocation5]
    $region57: #{tpu_custom_call.1} parent=1 // pred_fallthru
      _
    // Predicated region
    $region58: #{tpu_custom_call.1} parent=1 // pred_check
      _
    $region59: #{tpu_custom_call.1} parent=1 // pred_check_branch
      %528 = sbr.rel (0) target = $region61
    $region60: #{tpu_custom_call.1} parent=1 // pred_region
      %529 = dma.done [#allocation5], 128
    $region61: #{tpu_custom_call.1} parent=1 // pred_fallthru
      _
    %530 = vsyncpa [#allocation4], 1
    %531 = vsyncpa [#allocation7], 1
    %532 = vsyncpa [#allocation10], 1
    %533 = vsyncpa [#allocation5], 1

</llo_original>
